<compile_context>
chip_gen: v7x
topology: tpu7x:2x2x1
jax: 0.10.0
libtpu: 0.0.40
codegen_flags: <defaults>
</compile_context>

<pallas_src>
import math

import jax
import jax.numpy as jnp
from jax import lax
from jax.experimental import pallas as pl
from jax.experimental.pallas import tpu as pltpu


def _level_params(H, W, level):
    kh = math.ceil(H / level)
    kw = math.ceil(W / level)
    sh, sw = kh, kw
    ph = (kh * level - H + 1) // 2      # floor(...) -- argument is >= 1
    pw = (kw * level - W + 1) // 2
    # PyTorch's max_pool2d requires pad <= kernel // 2.  This also guarantees
    # every pooling window intersects the valid region, which is what makes the
    # clamp-to-valid slices in the kernel exactly equivalent to -inf padding.
    if ph > kh // 2 or pw > kw // 2:
        raise ValueError(
            f"SPP level {level} invalid for input {H}x{W}: padding ({ph},{pw}) "
            f"exceeds half the kernel ({kh},{kw}); PyTorch F.max_pool2d rejects "
            "this configuration as well.")
    oh = (H + 2 * ph - kh) // sh + 1
    ow = (W + 2 * pw - kw) // sw + 1
    assert oh >= 1 and ow >= 1
    return kh, kw, sh, sw, ph, pw, oh, ow


def _divisors(n):
    return [d for d in range(1, n + 1) if n % d == 0]


def _needs_f32_widen(dtype):
    """Widen sub-32-bit floats to f32 only on chips without bf16 VPU ALUs (v5e
    and earlier).  Max is exact under the round trip, so this is purely perf."""
    dt = jnp.dtype(dtype)
    if not (jnp.issubdtype(dt, jnp.floating) and dt.itemsize < 4):
        return False
    try:
        kind = jax.devices()[0].device_kind.lower()
    except Exception:
        return True                       # unknown hardware: widen (always safe)
    return not any(tag in kind for tag in ("v6", "v7"))


def _pick_tiles(N, C, H, W, P_total, in_itemsize, out_itemsize, widen):
    """VMEM-aware (c_tile, n_tile) picker plus optional scoped-VMEM limit."""
    budget = 24 * 2 ** 20                 # conservative: v7x physical is 64 MiB/TC

    def tile_bytes(nt, ct):
        inp = nt * H * W * ct * in_itemsize
        out = nt * P_total * ct * out_itemsize
        live = W * ct * (4 if widen else in_itemsize) * 8   # a few live row tiles
        return 2 * (inp + out) + live                       # double-buffered DMA

    # Channel tile: full C unless too big; only split on multiples of 128 so the
    # lane dimension of the BlockSpecs stays legal (divisible-by-128 rule).
    c_tile = C
    if tile_bytes(1, C) > budget:
        cands = [d for d in range(128, C, 128) if C % d == 0]
        fitting = [d for d in cands if tile_bytes(1, d) <= budget]
        if fitting:
            c_tile = max(fitting)
        elif cands:
            c_tile = min(cands)
    n_ct = C // c_tile

    # Sample tile: amortize the ~0.35us per-grid-step overhead when tiles are
    # tiny, but keep >= 2 grid steps whenever possible (v7x has 2 TensorCores
    # and shards "parallel" grid axes across them).
    n_tile = 1
    min_steps = min(2, N * n_ct)
    for d in _divisors(N):                                  # ascending
        if tile_bytes(d, c_tile) > min(budget, 4 * 2 ** 20):
            break
        if (N // d) * n_ct < min_steps:
            break
        n_tile = d

    est = tile_bytes(n_tile, c_tile)
    vmem_limit = None
    if est > 8 * 2 ** 20:                 # v5e default scoped VMEM is only 16 MiB
        vmem_limit = int(min(max(2 * est, 32 * 2 ** 20), 60 * 2 ** 20))
    return c_tile, n_tile, vmem_limit


def _make_fused_spp_kernel(H, W, level_params, n_tile, widen):
    """One body computing every pyramid level for an (n_tile, H, W, c_tile) block."""

    def load_row(x_ref, b, h):
        row = x_ref[b, h, :, :]                       # (W, c_tile) lane-dense load
        if widen:
            row = row.astype(jnp.float32)             # v5e only: no bf16 VPU ALUs
        return row

    def kernel(x_ref, o_ref):
        for b in range(n_tile):
            rows = []                                 # output rows, PyTorch order
            for (kh, kw, sh, sw, ph, pw, oh_n, ow_n) in level_params:
                for oh in range(oh_n):
                    # stride == kernel: all windows of this output row share the
                    # same H range.  Reduce over H with plain VPU maxima across
                    # per-row ref loads (bounded live set, no XLU, full lanes).
                    hs = max(oh * sh - ph, 0)
                    he = min(oh * sh - ph + kh, H)
                    xh = load_row(x_ref, b, hs)
                    for h in range(hs + 1, he):
                        xh = jnp.maximum(xh, load_row(x_ref, b, h))  # (W, c_tile)
                    for ow in range(ow_n):
                        ws = max(ow * sw - pw, 0)
                        we = min(ow * sw - pw + kw, W)
                        # Small sublane-range max (<= kw rows), lane-dense result.
                        rows.append(jnp.max(xh[ws:we, :], axis=0, keepdims=True))
            # One lane-dense, sublane-aligned store per sample for ALL levels.
            slab = rows[0] if len(rows) == 1 else jnp.concatenate(rows, axis=0)
            o_ref[b, :, :] = slab.astype(o_ref.dtype)

    return kernel


def spp_layer(x_nchw, num_levels):
    """SPPLayer forward.  x_nchw: (N, C, H, W) -> (N, sum_l C*oh_l*ow_l)."""
    N, C, H, W = x_nchw.shape
    params = [_level_params(H, W, int(level)) for level in num_levels]
    sizes = [oh * ow for (_, _, _, _, _, _, oh, ow) in params]
    P_total = sum(sizes)

    widen = _needs_f32_widen(x_nchw.dtype)
    itemsize = jnp.dtype(x_nchw.dtype).itemsize
    c_tile, n_tile, vmem_limit = _pick_tiles(
        N, C, H, W, P_total, itemsize, itemsize, widen)
    assert C % c_tile == 0 and N % n_tile == 0, (C, c_tile, N, n_tile)

    # One cheap XLA transpose puts channels on the 128-lane axis; it is read once
    # by the fused kernel and amortized over every pyramid level.
    x_nhwc = jnp.transpose(x_nchw, (0, 2, 3, 1))

    out = pl.pallas_call(
        _make_fused_spp_kernel(H, W, params, n_tile, widen),
        out_shape=jax.ShapeDtypeStruct((N, P_total, C), x_nchw.dtype),
        grid=(N // n_tile, C // c_tile),
        in_specs=[pl.BlockSpec((n_tile, H, W, c_tile),
                               lambda n, t: (n, 0, 0, t))],
        out_specs=pl.BlockSpec((n_tile, P_total, c_tile),
                               lambda n, t: (n, 0, t)),
        compiler_params=pltpu.CompilerParams(
            dimension_semantics=("parallel", "parallel"),
            vmem_limit_bytes=vmem_limit),
    )(x_nhwc)

    # Per level: (N, oh*ow, C) -> (N, C, oh*ow) -> (N, C*oh*ow), which is exactly
    # PyTorch's NCHW .view(num, -1) order.  These transposes/reshapes plus the
    # single concat run once in XLA on a tiny (N, P_total, C) tensor.
    pieces = []
    start = 0
    for level, sz in zip(num_levels, sizes):
        seg = out[:, start:start + sz, :]
        start += sz
        flat = jnp.transpose(seg, (0, 2, 1)).reshape(N, -1)
        if level == num_levels[0]:
            # Mirrors the PyTorch control flow exactly (a duplicate of the first
            # level later in num_levels resets the accumulation there too).
            pieces = [flat]
        else:
            pieces.append(flat)
    return pieces[0] if len(pieces) == 1 else jnp.concatenate(pieces, axis=1)


def _spp_reference(x_nchw, num_levels):
    """Independent pure-JAX reference using lax.reduce_window (-inf padding)."""
    N, C, H, W = x_nchw.shape
    pieces = []
    for level in num_levels:
        kh = math.ceil(H / level)
        kw = math.ceil(W / level)
        ph = (kh * level - H + 1) // 2
        pw = (kw * level - W + 1) // 2
        pooled = lax.reduce_window(
            x_nchw,
            -jnp.inf,
            lax.max,
            window_dimensions=(1, 1, kh, kw),
            window_strides=(1, 1, kh, kw),
            padding=[(0, 0), (0, 0), (ph, ph), (pw, pw)],
        )
        flat = pooled.reshape(N, -1)
        if level == num_levels[0]:
            pieces = [flat]
        else:
            pieces.append(flat)
    return pieces[0] if len(pieces) == 1 else jnp.concatenate(pieces, axis=1)


if __name__ == "__main__":
    # SPPLayer has no learnable parameters; only the `num_levels` config.
    num_levels = [1, 2, 3, 4]

    key = jax.random.PRNGKey(0)
    N, C, H, W = 2, 4, 16, 16
    x = jax.random.normal(key, (N, C, H, W), dtype=jnp.float32)

    out = spp_layer(x, num_levels)
    out = jax.block_until_ready(out)

    ref = _spp_reference(x, num_levels)
    assert out.shape == ref.shape, (out.shape, ref.shape)
    assert jnp.allclose(out, ref, atol=1e-6), "mismatch vs reference max-pool"

    print("KERNEL_OK")
</pallas_src>

<mosaic_0001>
module attributes {stable_mosaic.version = 11 : i64} {
  func.func @kernel(%arg0: i32, %arg1: i32, %arg2: memref<1x16x16x4xf32, #tpu.memory_space<vmem>>, %arg3: memref<1x30x4xf32, #tpu.memory_space<vmem>>) attributes {dimension_semantics = [#tpu.dimension_semantics<parallel>, #tpu.dimension_semantics<parallel>], iteration_bounds = array<i64: 2, 1>, scalar_prefetch = 0 : i64, scratch_operands = 0 : i64, tpu.core_type = #tpu.core_type<tc>, window_params = [{transform_indices = @transform_0, window_bounds = array<i64: 1, 16, 16, 4>}, {transform_indices = @transform_1, window_bounds = array<i64: 1, 30, 4>}]} {
    %c0 = arith.constant 0 : index
    %c0_0 = arith.constant 0 : index
    %c0_1 = arith.constant 0 : index
    %c0_2 = arith.constant 0 : index
    %0 = vector.load %arg2[%c0, %c0_0, %c0_1, %c0_2] : memref<1x16x16x4xf32, #tpu.memory_space<vmem>>, vector<1x1x16x4xf32>
    %1 = vector.shape_cast %0 : vector<1x1x16x4xf32> to vector<16x4xf32>
    %c0_3 = arith.constant 0 : index
    %c1 = arith.constant 1 : index
    %c0_4 = arith.constant 0 : index
    %c0_5 = arith.constant 0 : index
    %2 = vector.load %arg2[%c0_3, %c1, %c0_4, %c0_5] : memref<1x16x16x4xf32, #tpu.memory_space<vmem>>, vector<1x1x16x4xf32>
    %3 = vector.shape_cast %2 : vector<1x1x16x4xf32> to vector<16x4xf32>
    %4 = arith.maximumf %1, %3 : vector<16x4xf32>
    %c0_6 = arith.constant 0 : index
    %c2 = arith.constant 2 : index
    %c0_7 = arith.constant 0 : index
    %c0_8 = arith.constant 0 : index
    %5 = vector.load %arg2[%c0_6, %c2, %c0_7, %c0_8] : memref<1x16x16x4xf32, #tpu.memory_space<vmem>>, vector<1x1x16x4xf32>
    %6 = vector.shape_cast %5 : vector<1x1x16x4xf32> to vector<16x4xf32>
    %7 = arith.maximumf %4, %6 : vector<16x4xf32>
    %c0_9 = arith.constant 0 : index
    %c3 = arith.constant 3 : index
    %c0_10 = arith.constant 0 : index
    %c0_11 = arith.constant 0 : index
    %8 = vector.load %arg2[%c0_9, %c3, %c0_10, %c0_11] : memref<1x16x16x4xf32, #tpu.memory_space<vmem>>, vector<1x1x16x4xf32>
    %9 = vector.shape_cast %8 : vector<1x1x16x4xf32> to vector<16x4xf32>
    %10 = arith.maximumf %7, %9 : vector<16x4xf32>
    %c0_12 = arith.constant 0 : index
    %c4 = arith.constant 4 : index
    %c0_13 = arith.constant 0 : index
    %c0_14 = arith.constant 0 : index
    %11 = vector.load %arg2[%c0_12, %c4, %c0_13, %c0_14] : memref<1x16x16x4xf32, #tpu.memory_space<vmem>>, vector<1x1x16x4xf32>
    %12 = vector.shape_cast %11 : vector<1x1x16x4xf32> to vector<16x4xf32>
    %13 = arith.maximumf %10, %12 : vector<16x4xf32>
    %c0_15 = arith.constant 0 : index
    %c5 = arith.constant 5 : index
    %c0_16 = arith.constant 0 : index
    %c0_17 = arith.constant 0 : index
    %14 = vector.load %arg2[%c0_15, %c5, %c0_16, %c0_17] : memref<1x16x16x4xf32, #tpu.memory_space<vmem>>, vector<1x1x16x4xf32>
    %15 = vector.shape_cast %14 : vector<1x1x16x4xf32> to vector<16x4xf32>
    %16 = arith.maximumf %13, %15 : vector<16x4xf32>
    %c0_18 = arith.constant 0 : index
    %c6 = arith.constant 6 : index
    %c0_19 = arith.constant 0 : index
    %c0_20 = arith.constant 0 : index
    %17 = vector.load %arg2[%c0_18, %c6, %c0_19, %c0_20] : memref<1x16x16x4xf32, #tpu.memory_space<vmem>>, vector<1x1x16x4xf32>
    %18 = vector.shape_cast %17 : vector<1x1x16x4xf32> to vector<16x4xf32>
    %19 = arith.maximumf %16, %18 : vector<16x4xf32>
    %c0_21 = arith.constant 0 : index
    %c7 = arith.constant 7 : index
    %c0_22 = arith.constant 0 : index
    %c0_23 = arith.constant 0 : index
    %20 = vector.load %arg2[%c0_21, %c7, %c0_22, %c0_23] : memref<1x16x16x4xf32, #tpu.memory_space<vmem>>, vector<1x1x16x4xf32>
    %21 = vector.shape_cast %20 : vector<1x1x16x4xf32> to vector<16x4xf32>
    %22 = arith.maximumf %19, %21 : vector<16x4xf32>
    %c0_24 = arith.constant 0 : index
    %c8 = arith.constant 8 : index
    %c0_25 = arith.constant 0 : index
    %c0_26 = arith.constant 0 : index
    %23 = vector.load %arg2[%c0_24, %c8, %c0_25, %c0_26] : memref<1x16x16x4xf32, #tpu.memory_space<vmem>>, vector<1x1x16x4xf32>
    %24 = vector.shape_cast %23 : vector<1x1x16x4xf32> to vector<16x4xf32>
    %25 = arith.maximumf %22, %24 : vector<16x4xf32>
    %c0_27 = arith.constant 0 : index
    %c9 = arith.constant 9 : index
    %c0_28 = arith.constant 0 : index
    %c0_29 = arith.constant 0 : index
    %26 = vector.load %arg2[%c0_27, %c9, %c0_28, %c0_29] : memref<1x16x16x4xf32, #tpu.memory_space<vmem>>, vector<1x1x16x4xf32>
    %27 = vector.shape_cast %26 : vector<1x1x16x4xf32> to vector<16x4xf32>
    %28 = arith.maximumf %25, %27 : vector<16x4xf32>
    %c0_30 = arith.constant 0 : index
    %c10 = arith.constant 10 : index
    %c0_31 = arith.constant 0 : index
    %c0_32 = arith.constant 0 : index
    %29 = vector.load %arg2[%c0_30, %c10, %c0_31, %c0_32] : memref<1x16x16x4xf32, #tpu.memory_space<vmem>>, vector<1x1x16x4xf32>
    %30 = vector.shape_cast %29 : vector<1x1x16x4xf32> to vector<16x4xf32>
    %31 = arith.maximumf %28, %30 : vector<16x4xf32>
    %c0_33 = arith.constant 0 : index
    %c11 = arith.constant 11 : index
    %c0_34 = arith.constant 0 : index
    %c0_35 = arith.constant 0 : index
    %32 = vector.load %arg2[%c0_33, %c11, %c0_34, %c0_35] : memref<1x16x16x4xf32, #tpu.memory_space<vmem>>, vector<1x1x16x4xf32>
    %33 = vector.shape_cast %32 : vector<1x1x16x4xf32> to vector<16x4xf32>
    %34 = arith.maximumf %31, %33 : vector<16x4xf32>
    %c0_36 = arith.constant 0 : index
    %c12 = arith.constant 12 : index
    %c0_37 = arith.constant 0 : index
    %c0_38 = arith.constant 0 : index
    %35 = vector.load %arg2[%c0_36, %c12, %c0_37, %c0_38] : memref<1x16x16x4xf32, #tpu.memory_space<vmem>>, vector<1x1x16x4xf32>
    %36 = vector.shape_cast %35 : vector<1x1x16x4xf32> to vector<16x4xf32>
    %37 = arith.maximumf %34, %36 : vector<16x4xf32>
    %c0_39 = arith.constant 0 : index
    %c13 = arith.constant 13 : index
    %c0_40 = arith.constant 0 : index
    %c0_41 = arith.constant 0 : index
    %38 = vector.load %arg2[%c0_39, %c13, %c0_40, %c0_41] : memref<1x16x16x4xf32, #tpu.memory_space<vmem>>, vector<1x1x16x4xf32>
    %39 = vector.shape_cast %38 : vector<1x1x16x4xf32> to vector<16x4xf32>
    %40 = arith.maximumf %37, %39 : vector<16x4xf32>
    %c0_42 = arith.constant 0 : index
    %c14 = arith.constant 14 : index
    %c0_43 = arith.constant 0 : index
    %c0_44 = arith.constant 0 : index
    %41 = vector.load %arg2[%c0_42, %c14, %c0_43, %c0_44] : memref<1x16x16x4xf32, #tpu.memory_space<vmem>>, vector<1x1x16x4xf32>
    %42 = vector.shape_cast %41 : vector<1x1x16x4xf32> to vector<16x4xf32>
    %43 = arith.maximumf %40, %42 : vector<16x4xf32>
    %c0_45 = arith.constant 0 : index
    %c15 = arith.constant 15 : index
    %c0_46 = arith.constant 0 : index
    %c0_47 = arith.constant 0 : index
    %44 = vector.load %arg2[%c0_45, %c15, %c0_46, %c0_47] : memref<1x16x16x4xf32, #tpu.memory_space<vmem>>, vector<1x1x16x4xf32>
    %45 = vector.shape_cast %44 : vector<1x1x16x4xf32> to vector<16x4xf32>
    %46 = arith.maximumf %43, %45 : vector<16x4xf32>
    %cst = arith.constant dense<0xFF800000> : vector<4xf32>
    %47 = vector.multi_reduction <maximumf>, %46, %cst [0] : vector<16x4xf32> to vector<4xf32>
    %48 = vector.shape_cast %47 : vector<4xf32> to vector<1x4xf32>
    %c0_48 = arith.constant 0 : index
    %c0_49 = arith.constant 0 : index
    %c0_50 = arith.constant 0 : index
    %c0_51 = arith.constant 0 : index
    %49 = vector.load %arg2[%c0_48, %c0_49, %c0_50, %c0_51] : memref<1x16x16x4xf32, #tpu.memory_space<vmem>>, vector<1x1x16x4xf32>
    %50 = vector.shape_cast %49 : vector<1x1x16x4xf32> to vector<16x4xf32>
    %c0_52 = arith.constant 0 : index
    %c1_53 = arith.constant 1 : index
    %c0_54 = arith.constant 0 : index
    %c0_55 = arith.constant 0 : index
    %51 = vector.load %arg2[%c0_52, %c1_53, %c0_54, %c0_55] : memref<1x16x16x4xf32, #tpu.memory_space<vmem>>, vector<1x1x16x4xf32>
    %52 = vector.shape_cast %51 : vector<1x1x16x4xf32> to vector<16x4xf32>
    %53 = arith.maximumf %50, %52 : vector<16x4xf32>
    %c0_56 = arith.constant 0 : index
    %c2_57 = arith.constant 2 : index
    %c0_58 = arith.constant 0 : index
    %c0_59 = arith.constant 0 : index
    %54 = vector.load %arg2[%c0_56, %c2_57, %c0_58, %c0_59] : memref<1x16x16x4xf32, #tpu.memory_space<vmem>>, vector<1x1x16x4xf32>
    %55 = vector.shape_cast %54 : vector<1x1x16x4xf32> to vector<16x4xf32>
    %56 = arith.maximumf %53, %55 : vector<16x4xf32>
    %c0_60 = arith.constant 0 : index
    %c3_61 = arith.constant 3 : index
    %c0_62 = arith.constant 0 : index
    %c0_63 = arith.constant 0 : index
    %57 = vector.load %arg2[%c0_60, %c3_61, %c0_62, %c0_63] : memref<1x16x16x4xf32, #tpu.memory_space<vmem>>, vector<1x1x16x4xf32>
    %58 = vector.shape_cast %57 : vector<1x1x16x4xf32> to vector<16x4xf32>
    %59 = arith.maximumf %56, %58 : vector<16x4xf32>
    %c0_64 = arith.constant 0 : index
    %c4_65 = arith.constant 4 : index
    %c0_66 = arith.constant 0 : index
    %c0_67 = arith.constant 0 : index
    %60 = vector.load %arg2[%c0_64, %c4_65, %c0_66, %c0_67] : memref<1x16x16x4xf32, #tpu.memory_space<vmem>>, vector<1x1x16x4xf32>
    %61 = vector.shape_cast %60 : vector<1x1x16x4xf32> to vector<16x4xf32>
    %62 = arith.maximumf %59, %61 : vector<16x4xf32>
    %c0_68 = arith.constant 0 : index
    %c5_69 = arith.constant 5 : index
    %c0_70 = arith.constant 0 : index
    %c0_71 = arith.constant 0 : index
    %63 = vector.load %arg2[%c0_68, %c5_69, %c0_70, %c0_71] : memref<1x16x16x4xf32, #tpu.memory_space<vmem>>, vector<1x1x16x4xf32>
    %64 = vector.shape_cast %63 : vector<1x1x16x4xf32> to vector<16x4xf32>
    %65 = arith.maximumf %62, %64 : vector<16x4xf32>
    %c0_72 = arith.constant 0 : index
    %c6_73 = arith.constant 6 : index
    %c0_74 = arith.constant 0 : index
    %c0_75 = arith.constant 0 : index
    %66 = vector.load %arg2[%c0_72, %c6_73, %c0_74, %c0_75] : memref<1x16x16x4xf32, #tpu.memory_space<vmem>>, vector<1x1x16x4xf32>
    %67 = vector.shape_cast %66 : vector<1x1x16x4xf32> to vector<16x4xf32>
    %68 = arith.maximumf %65, %67 : vector<16x4xf32>
    %c0_76 = arith.constant 0 : index
    %c7_77 = arith.constant 7 : index
    %c0_78 = arith.constant 0 : index
    %c0_79 = arith.constant 0 : index
    %69 = vector.load %arg2[%c0_76, %c7_77, %c0_78, %c0_79] : memref<1x16x16x4xf32, #tpu.memory_space<vmem>>, vector<1x1x16x4xf32>
    %70 = vector.shape_cast %69 : vector<1x1x16x4xf32> to vector<16x4xf32>
    %71 = arith.maximumf %68, %70 : vector<16x4xf32>
    %72 = vector.extract_strided_slice %71 {offsets = [0, 0], sizes = [8, 4], strides = [1, 1]} : vector<16x4xf32> to vector<8x4xf32>
    %cst_80 = arith.constant dense<0xFF800000> : vector<4xf32>
    %73 = vector.multi_reduction <maximumf>, %72, %cst_80 [0] : vector<8x4xf32> to vector<4xf32>
    %74 = vector.shape_cast %73 : vector<4xf32> to vector<1x4xf32>
    %75 = vector.extract_strided_slice %71 {offsets = [8, 0], sizes = [8, 4], strides = [1, 1]} : vector<16x4xf32> to vector<8x4xf32>
    %cst_81 = arith.constant dense<0xFF800000> : vector<4xf32>
    %76 = vector.multi_reduction <maximumf>, %75, %cst_81 [0] : vector<8x4xf32> to vector<4xf32>
    %77 = vector.shape_cast %76 : vector<4xf32> to vector<1x4xf32>
    %c0_82 = arith.constant 0 : index
    %c8_83 = arith.constant 8 : index
    %c0_84 = arith.constant 0 : index
    %c0_85 = arith.constant 0 : index
    %78 = vector.load %arg2[%c0_82, %c8_83, %c0_84, %c0_85] : memref<1x16x16x4xf32, #tpu.memory_space<vmem>>, vector<1x1x16x4xf32>
    %79 = vector.shape_cast %78 : vector<1x1x16x4xf32> to vector<16x4xf32>
    %c0_86 = arith.constant 0 : index
    %c9_87 = arith.constant 9 : index
    %c0_88 = arith.constant 0 : index
    %c0_89 = arith.constant 0 : index
    %80 = vector.load %arg2[%c0_86, %c9_87, %c0_88, %c0_89] : memref<1x16x16x4xf32, #tpu.memory_space<vmem>>, vector<1x1x16x4xf32>
    %81 = vector.shape_cast %80 : vector<1x1x16x4xf32> to vector<16x4xf32>
    %82 = arith.maximumf %79, %81 : vector<16x4xf32>
    %c0_90 = arith.constant 0 : index
    %c10_91 = arith.constant 10 : index
    %c0_92 = arith.constant 0 : index
    %c0_93 = arith.constant 0 : index
    %83 = vector.load %arg2[%c0_90, %c10_91, %c0_92, %c0_93] : memref<1x16x16x4xf32, #tpu.memory_space<vmem>>, vector<1x1x16x4xf32>
    %84 = vector.shape_cast %83 : vector<1x1x16x4xf32> to vector<16x4xf32>
    %85 = arith.maximumf %82, %84 : vector<16x4xf32>
    %c0_94 = arith.constant 0 : index
    %c11_95 = arith.constant 11 : index
    %c0_96 = arith.constant 0 : index
    %c0_97 = arith.constant 0 : index
    %86 = vector.load %arg2[%c0_94, %c11_95, %c0_96, %c0_97] : memref<1x16x16x4xf32, #tpu.memory_space<vmem>>, vector<1x1x16x4xf32>
    %87 = vector.shape_cast %86 : vector<1x1x16x4xf32> to vector<16x4xf32>
    %88 = arith.maximumf %85, %87 : vector<16x4xf32>
    %c0_98 = arith.constant 0 : index
    %c12_99 = arith.constant 12 : index
    %c0_100 = arith.constant 0 : index
    %c0_101 = arith.constant 0 : index
    %89 = vector.load %arg2[%c0_98, %c12_99, %c0_100, %c0_101] : memref<1x16x16x4xf32, #tpu.memory_space<vmem>>, vector<1x1x16x4xf32>
    %90 = vector.shape_cast %89 : vector<1x1x16x4xf32> to vector<16x4xf32>
    %91 = arith.maximumf %88, %90 : vector<16x4xf32>
    %c0_102 = arith.constant 0 : index
    %c13_103 = arith.constant 13 : index
    %c0_104 = arith.constant 0 : index
    %c0_105 = arith.constant 0 : index
    %92 = vector.load %arg2[%c0_102, %c13_103, %c0_104, %c0_105] : memref<1x16x16x4xf32, #tpu.memory_space<vmem>>, vector<1x1x16x4xf32>
    %93 = vector.shape_cast %92 : vector<1x1x16x4xf32> to vector<16x4xf32>
    %94 = arith.maximumf %91, %93 : vector<16x4xf32>
    %c0_106 = arith.constant 0 : index
    %c14_107 = arith.constant 14 : index
    %c0_108 = arith.constant 0 : index
    %c0_109 = arith.constant 0 : index
    %95 = vector.load %arg2[%c0_106, %c14_107, %c0_108, %c0_109] : memref<1x16x16x4xf32, #tpu.memory_space<vmem>>, vector<1x1x16x4xf32>
    %96 = vector.shape_cast %95 : vector<1x1x16x4xf32> to vector<16x4xf32>
    %97 = arith.maximumf %94, %96 : vector<16x4xf32>
    %c0_110 = arith.constant 0 : index
    %c15_111 = arith.constant 15 : index
    %c0_112 = arith.constant 0 : index
    %c0_113 = arith.constant 0 : index
    %98 = vector.load %arg2[%c0_110, %c15_111, %c0_112, %c0_113] : memref<1x16x16x4xf32, #tpu.memory_space<vmem>>, vector<1x1x16x4xf32>
    %99 = vector.shape_cast %98 : vector<1x1x16x4xf32> to vector<16x4xf32>
    %100 = arith.maximumf %97, %99 : vector<16x4xf32>
    %101 = vector.extract_strided_slice %100 {offsets = [0, 0], sizes = [8, 4], strides = [1, 1]} : vector<16x4xf32> to vector<8x4xf32>
    %cst_114 = arith.constant dense<0xFF800000> : vector<4xf32>
    %102 = vector.multi_reduction <maximumf>, %101, %cst_114 [0] : vector<8x4xf32> to vector<4xf32>
    %103 = vector.shape_cast %102 : vector<4xf32> to vector<1x4xf32>
    %104 = vector.extract_strided_slice %100 {offsets = [8, 0], sizes = [8, 4], strides = [1, 1]} : vector<16x4xf32> to vector<8x4xf32>
    %cst_115 = arith.constant dense<0xFF800000> : vector<4xf32>
    %105 = vector.multi_reduction <maximumf>, %104, %cst_115 [0] : vector<8x4xf32> to vector<4xf32>
    %106 = vector.shape_cast %105 : vector<4xf32> to vector<1x4xf32>
    %c0_116 = arith.constant 0 : index
    %c0_117 = arith.constant 0 : index
    %c0_118 = arith.constant 0 : index
    %c0_119 = arith.constant 0 : index
    %107 = vector.load %arg2[%c0_116, %c0_117, %c0_118, %c0_119] : memref<1x16x16x4xf32, #tpu.memory_space<vmem>>, vector<1x1x16x4xf32>
    %108 = vector.shape_cast %107 : vector<1x1x16x4xf32> to vector<16x4xf32>
    %c0_120 = arith.constant 0 : index
    %c1_121 = arith.constant 1 : index
    %c0_122 = arith.constant 0 : index
    %c0_123 = arith.constant 0 : index
    %109 = vector.load %arg2[%c0_120, %c1_121, %c0_122, %c0_123] : memref<1x16x16x4xf32, #tpu.memory_space<vmem>>, vector<1x1x16x4xf32>
    %110 = vector.shape_cast %109 : vector<1x1x16x4xf32> to vector<16x4xf32>
    %111 = arith.maximumf %108, %110 : vector<16x4xf32>
    %c0_124 = arith.constant 0 : index
    %c2_125 = arith.constant 2 : index
    %c0_126 = arith.constant 0 : index
    %c0_127 = arith.constant 0 : index
    %112 = vector.load %arg2[%c0_124, %c2_125, %c0_126, %c0_127] : memref<1x16x16x4xf32, #tpu.memory_space<vmem>>, vector<1x1x16x4xf32>
    %113 = vector.shape_cast %112 : vector<1x1x16x4xf32> to vector<16x4xf32>
    %114 = arith.maximumf %111, %113 : vector<16x4xf32>
    %c0_128 = arith.constant 0 : index
    %c3_129 = arith.constant 3 : index
    %c0_130 = arith.constant 0 : index
    %c0_131 = arith.constant 0 : index
    %115 = vector.load %arg2[%c0_128, %c3_129, %c0_130, %c0_131] : memref<1x16x16x4xf32, #tpu.memory_space<vmem>>, vector<1x1x16x4xf32>
    %116 = vector.shape_cast %115 : vector<1x1x16x4xf32> to vector<16x4xf32>
    %117 = arith.maximumf %114, %116 : vector<16x4xf32>
    %c0_132 = arith.constant 0 : index
    %c4_133 = arith.constant 4 : index
    %c0_134 = arith.constant 0 : index
    %c0_135 = arith.constant 0 : index
    %118 = vector.load %arg2[%c0_132, %c4_133, %c0_134, %c0_135] : memref<1x16x16x4xf32, #tpu.memory_space<vmem>>, vector<1x1x16x4xf32>
    %119 = vector.shape_cast %118 : vector<1x1x16x4xf32> to vector<16x4xf32>
    %120 = arith.maximumf %117, %119 : vector<16x4xf32>
    %121 = vector.extract_strided_slice %120 {offsets = [0, 0], sizes = [5, 4], strides = [1, 1]} : vector<16x4xf32> to vector<5x4xf32>
    %cst_136 = arith.constant dense<0xFF800000> : vector<4xf32>
    %122 = vector.multi_reduction <maximumf>, %121, %cst_136 [0] : vector<5x4xf32> to vector<4xf32>
    %123 = vector.shape_cast %122 : vector<4xf32> to vector<1x4xf32>
    %124 = vector.extract_strided_slice %120 {offsets = [5, 0], sizes = [6, 4], strides = [1, 1]} : vector<16x4xf32> to vector<6x4xf32>
    %cst_137 = arith.constant dense<0xFF800000> : vector<4xf32>
    %125 = vector.multi_reduction <maximumf>, %124, %cst_137 [0] : vector<6x4xf32> to vector<4xf32>
    %126 = vector.shape_cast %125 : vector<4xf32> to vector<1x4xf32>
    %127 = vector.extract_strided_slice %120 {offsets = [11, 0], sizes = [5, 4], strides = [1, 1]} : vector<16x4xf32> to vector<5x4xf32>
    %cst_138 = arith.constant dense<0xFF800000> : vector<4xf32>
    %128 = vector.multi_reduction <maximumf>, %127, %cst_138 [0] : vector<5x4xf32> to vector<4xf32>
    %129 = vector.shape_cast %128 : vector<4xf32> to vector<1x4xf32>
    %c0_139 = arith.constant 0 : index
    %c5_140 = arith.constant 5 : index
    %c0_141 = arith.constant 0 : index
    %c0_142 = arith.constant 0 : index
    %130 = vector.load %arg2[%c0_139, %c5_140, %c0_141, %c0_142] : memref<1x16x16x4xf32, #tpu.memory_space<vmem>>, vector<1x1x16x4xf32>
    %131 = vector.shape_cast %130 : vector<1x1x16x4xf32> to vector<16x4xf32>
    %c0_143 = arith.constant 0 : index
    %c6_144 = arith.constant 6 : index
    %c0_145 = arith.constant 0 : index
    %c0_146 = arith.constant 0 : index
    %132 = vector.load %arg2[%c0_143, %c6_144, %c0_145, %c0_146] : memref<1x16x16x4xf32, #tpu.memory_space<vmem>>, vector<1x1x16x4xf32>
    %133 = vector.shape_cast %132 : vector<1x1x16x4xf32> to vector<16x4xf32>
    %134 = arith.maximumf %131, %133 : vector<16x4xf32>
    %c0_147 = arith.constant 0 : index
    %c7_148 = arith.constant 7 : index
    %c0_149 = arith.constant 0 : index
    %c0_150 = arith.constant 0 : index
    %135 = vector.load %arg2[%c0_147, %c7_148, %c0_149, %c0_150] : memref<1x16x16x4xf32, #tpu.memory_space<vmem>>, vector<1x1x16x4xf32>
    %136 = vector.shape_cast %135 : vector<1x1x16x4xf32> to vector<16x4xf32>
    %137 = arith.maximumf %134, %136 : vector<16x4xf32>
    %c0_151 = arith.constant 0 : index
    %c8_152 = arith.constant 8 : index
    %c0_153 = arith.constant 0 : index
    %c0_154 = arith.constant 0 : index
    %138 = vector.load %arg2[%c0_151, %c8_152, %c0_153, %c0_154] : memref<1x16x16x4xf32, #tpu.memory_space<vmem>>, vector<1x1x16x4xf32>
    %139 = vector.shape_cast %138 : vector<1x1x16x4xf32> to vector<16x4xf32>
    %140 = arith.maximumf %137, %139 : vector<16x4xf32>
    %c0_155 = arith.constant 0 : index
    %c9_156 = arith.constant 9 : index
    %c0_157 = arith.constant 0 : index
    %c0_158 = arith.constant 0 : index
    %141 = vector.load %arg2[%c0_155, %c9_156, %c0_157, %c0_158] : memref<1x16x16x4xf32, #tpu.memory_space<vmem>>, vector<1x1x16x4xf32>
    %142 = vector.shape_cast %141 : vector<1x1x16x4xf32> to vector<16x4xf32>
    %143 = arith.maximumf %140, %142 : vector<16x4xf32>
    %c0_159 = arith.constant 0 : index
    %c10_160 = arith.constant 10 : index
    %c0_161 = arith.constant 0 : index
    %c0_162 = arith.constant 0 : index
    %144 = vector.load %arg2[%c0_159, %c10_160, %c0_161, %c0_162] : memref<1x16x16x4xf32, #tpu.memory_space<vmem>>, vector<1x1x16x4xf32>
    %145 = vector.shape_cast %144 : vector<1x1x16x4xf32> to vector<16x4xf32>
    %146 = arith.maximumf %143, %145 : vector<16x4xf32>
    %147 = vector.extract_strided_slice %146 {offsets = [0, 0], sizes = [5, 4], strides = [1, 1]} : vector<16x4xf32> to vector<5x4xf32>
    %cst_163 = arith.constant dense<0xFF800000> : vector<4xf32>
    %148 = vector.multi_reduction <maximumf>, %147, %cst_163 [0] : vector<5x4xf32> to vector<4xf32>
    %149 = vector.shape_cast %148 : vector<4xf32> to vector<1x4xf32>
    %150 = vector.extract_strided_slice %146 {offsets = [5, 0], sizes = [6, 4], strides = [1, 1]} : vector<16x4xf32> to vector<6x4xf32>
    %cst_164 = arith.constant dense<0xFF800000> : vector<4xf32>
    %151 = vector.multi_reduction <maximumf>, %150, %cst_164 [0] : vector<6x4xf32> to vector<4xf32>
    %152 = vector.shape_cast %151 : vector<4xf32> to vector<1x4xf32>
    %153 = vector.extract_strided_slice %146 {offsets = [11, 0], sizes = [5, 4], strides = [1, 1]} : vector<16x4xf32> to vector<5x4xf32>
    %cst_165 = arith.constant dense<0xFF800000> : vector<4xf32>
    %154 = vector.multi_reduction <maximumf>, %153, %cst_165 [0] : vector<5x4xf32> to vector<4xf32>
    %155 = vector.shape_cast %154 : vector<4xf32> to vector<1x4xf32>
    %c0_166 = arith.constant 0 : index
    %c11_167 = arith.constant 11 : index
    %c0_168 = arith.constant 0 : index
    %c0_169 = arith.constant 0 : index
    %156 = vector.load %arg2[%c0_166, %c11_167, %c0_168, %c0_169] : memref<1x16x16x4xf32, #tpu.memory_space<vmem>>, vector<1x1x16x4xf32>
    %157 = vector.shape_cast %156 : vector<1x1x16x4xf32> to vector<16x4xf32>
    %c0_170 = arith.constant 0 : index
    %c12_171 = arith.constant 12 : index
    %c0_172 = arith.constant 0 : index
    %c0_173 = arith.constant 0 : index
    %158 = vector.load %arg2[%c0_170, %c12_171, %c0_172, %c0_173] : memref<1x16x16x4xf32, #tpu.memory_space<vmem>>, vector<1x1x16x4xf32>
    %159 = vector.shape_cast %158 : vector<1x1x16x4xf32> to vector<16x4xf32>
    %160 = arith.maximumf %157, %159 : vector<16x4xf32>
    %c0_174 = arith.constant 0 : index
    %c13_175 = arith.constant 13 : index
    %c0_176 = arith.constant 0 : index
    %c0_177 = arith.constant 0 : index
    %161 = vector.load %arg2[%c0_174, %c13_175, %c0_176, %c0_177] : memref<1x16x16x4xf32, #tpu.memory_space<vmem>>, vector<1x1x16x4xf32>
    %162 = vector.shape_cast %161 : vector<1x1x16x4xf32> to vector<16x4xf32>
    %163 = arith.maximumf %160, %162 : vector<16x4xf32>
    %c0_178 = arith.constant 0 : index
    %c14_179 = arith.constant 14 : index
    %c0_180 = arith.constant 0 : index
    %c0_181 = arith.constant 0 : index
    %164 = vector.load %arg2[%c0_178, %c14_179, %c0_180, %c0_181] : memref<1x16x16x4xf32, #tpu.memory_space<vmem>>, vector<1x1x16x4xf32>
    %165 = vector.shape_cast %164 : vector<1x1x16x4xf32> to vector<16x4xf32>
    %166 = arith.maximumf %163, %165 : vector<16x4xf32>
    %c0_182 = arith.constant 0 : index
    %c15_183 = arith.constant 15 : index
    %c0_184 = arith.constant 0 : index
    %c0_185 = arith.constant 0 : index
    %167 = vector.load %arg2[%c0_182, %c15_183, %c0_184, %c0_185] : memref<1x16x16x4xf32, #tpu.memory_space<vmem>>, vector<1x1x16x4xf32>
    %168 = vector.shape_cast %167 : vector<1x1x16x4xf32> to vector<16x4xf32>
    %169 = arith.maximumf %166, %168 : vector<16x4xf32>
    %170 = vector.extract_strided_slice %169 {offsets = [0, 0], sizes = [5, 4], strides = [1, 1]} : vector<16x4xf32> to vector<5x4xf32>
    %cst_186 = arith.constant dense<0xFF800000> : vector<4xf32>
    %171 = vector.multi_reduction <maximumf>, %170, %cst_186 [0] : vector<5x4xf32> to vector<4xf32>
    %172 = vector.shape_cast %171 : vector<4xf32> to vector<1x4xf32>
    %173 = vector.extract_strided_slice %169 {offsets = [5, 0], sizes = [6, 4], strides = [1, 1]} : vector<16x4xf32> to vector<6x4xf32>
    %cst_187 = arith.constant dense<0xFF800000> : vector<4xf32>
    %174 = vector.multi_reduction <maximumf>, %173, %cst_187 [0] : vector<6x4xf32> to vector<4xf32>
    %175 = vector.shape_cast %174 : vector<4xf32> to vector<1x4xf32>
    %176 = vector.extract_strided_slice %169 {offsets = [11, 0], sizes = [5, 4], strides = [1, 1]} : vector<16x4xf32> to vector<5x4xf32>
    %cst_188 = arith.constant dense<0xFF800000> : vector<4xf32>
    %177 = vector.multi_reduction <maximumf>, %176, %cst_188 [0] : vector<5x4xf32> to vector<4xf32>
    %178 = vector.shape_cast %177 : vector<4xf32> to vector<1x4xf32>
    %c0_189 = arith.constant 0 : index
    %c0_190 = arith.constant 0 : index
    %c0_191 = arith.constant 0 : index
    %c0_192 = arith.constant 0 : index
    %179 = vector.load %arg2[%c0_189, %c0_190, %c0_191, %c0_192] : memref<1x16x16x4xf32, #tpu.memory_space<vmem>>, vector<1x1x16x4xf32>
    %180 = vector.shape_cast %179 : vector<1x1x16x4xf32> to vector<16x4xf32>
    %c0_193 = arith.constant 0 : index
    %c1_194 = arith.constant 1 : index
    %c0_195 = arith.constant 0 : index
    %c0_196 = arith.constant 0 : index
    %181 = vector.load %arg2[%c0_193, %c1_194, %c0_195, %c0_196] : memref<1x16x16x4xf32, #tpu.memory_space<vmem>>, vector<1x1x16x4xf32>
    %182 = vector.shape_cast %181 : vector<1x1x16x4xf32> to vector<16x4xf32>
    %183 = arith.maximumf %180, %182 : vector<16x4xf32>
    %c0_197 = arith.constant 0 : index
    %c2_198 = arith.constant 2 : index
    %c0_199 = arith.constant 0 : index
    %c0_200 = arith.constant 0 : index
    %184 = vector.load %arg2[%c0_197, %c2_198, %c0_199, %c0_200] : memref<1x16x16x4xf32, #tpu.memory_space<vmem>>, vector<1x1x16x4xf32>
    %185 = vector.shape_cast %184 : vector<1x1x16x4xf32> to vector<16x4xf32>
    %186 = arith.maximumf %183, %185 : vector<16x4xf32>
    %c0_201 = arith.constant 0 : index
    %c3_202 = arith.constant 3 : index
    %c0_203 = arith.constant 0 : index
    %c0_204 = arith.constant 0 : index
    %187 = vector.load %arg2[%c0_201, %c3_202, %c0_203, %c0_204] : memref<1x16x16x4xf32, #tpu.memory_space<vmem>>, vector<1x1x16x4xf32>
    %188 = vector.shape_cast %187 : vector<1x1x16x4xf32> to vector<16x4xf32>
    %189 = arith.maximumf %186, %188 : vector<16x4xf32>
    %190 = vector.extract_strided_slice %189 {offsets = [0, 0], sizes = [4, 4], strides = [1, 1]} : vector<16x4xf32> to vector<4x4xf32>
    %cst_205 = arith.constant dense<0xFF800000> : vector<4xf32>
    %191 = vector.multi_reduction <maximumf>, %190, %cst_205 [0] : vector<4x4xf32> to vector<4xf32>
    %192 = vector.shape_cast %191 : vector<4xf32> to vector<1x4xf32>
    %193 = vector.extract_strided_slice %189 {offsets = [4, 0], sizes = [4, 4], strides = [1, 1]} : vector<16x4xf32> to vector<4x4xf32>
    %cst_206 = arith.constant dense<0xFF800000> : vector<4xf32>
    %194 = vector.multi_reduction <maximumf>, %193, %cst_206 [0] : vector<4x4xf32> to vector<4xf32>
    %195 = vector.shape_cast %194 : vector<4xf32> to vector<1x4xf32>
    %196 = vector.extract_strided_slice %189 {offsets = [8, 0], sizes = [4, 4], strides = [1, 1]} : vector<16x4xf32> to vector<4x4xf32>
    %cst_207 = arith.constant dense<0xFF800000> : vector<4xf32>
    %197 = vector.multi_reduction <maximumf>, %196, %cst_207 [0] : vector<4x4xf32> to vector<4xf32>
    %198 = vector.shape_cast %197 : vector<4xf32> to vector<1x4xf32>
    %199 = vector.extract_strided_slice %189 {offsets = [12, 0], sizes = [4, 4], strides = [1, 1]} : vector<16x4xf32> to vector<4x4xf32>
    %cst_208 = arith.constant dense<0xFF800000> : vector<4xf32>
    %200 = vector.multi_reduction <maximumf>, %199, %cst_208 [0] : vector<4x4xf32> to vector<4xf32>
    %201 = vector.shape_cast %200 : vector<4xf32> to vector<1x4xf32>
    %c0_209 = arith.constant 0 : index
    %c4_210 = arith.constant 4 : index
    %c0_211 = arith.constant 0 : index
    %c0_212 = arith.constant 0 : index
    %202 = vector.load %arg2[%c0_209, %c4_210, %c0_211, %c0_212] : memref<1x16x16x4xf32, #tpu.memory_space<vmem>>, vector<1x1x16x4xf32>
    %203 = vector.shape_cast %202 : vector<1x1x16x4xf32> to vector<16x4xf32>
    %c0_213 = arith.constant 0 : index
    %c5_214 = arith.constant 5 : index
    %c0_215 = arith.constant 0 : index
    %c0_216 = arith.constant 0 : index
    %204 = vector.load %arg2[%c0_213, %c5_214, %c0_215, %c0_216] : memref<1x16x16x4xf32, #tpu.memory_space<vmem>>, vector<1x1x16x4xf32>
    %205 = vector.shape_cast %204 : vector<1x1x16x4xf32> to vector<16x4xf32>
    %206 = arith.maximumf %203, %205 : vector<16x4xf32>
    %c0_217 = arith.constant 0 : index
    %c6_218 = arith.constant 6 : index
    %c0_219 = arith.constant 0 : index
    %c0_220 = arith.constant 0 : index
    %207 = vector.load %arg2[%c0_217, %c6_218, %c0_219, %c0_220] : memref<1x16x16x4xf32, #tpu.memory_space<vmem>>, vector<1x1x16x4xf32>
    %208 = vector.shape_cast %207 : vector<1x1x16x4xf32> to vector<16x4xf32>
    %209 = arith.maximumf %206, %208 : vector<16x4xf32>
    %c0_221 = arith.constant 0 : index
    %c7_222 = arith.constant 7 : index
    %c0_223 = arith.constant 0 : index
    %c0_224 = arith.constant 0 : index
    %210 = vector.load %arg2[%c0_221, %c7_222, %c0_223, %c0_224] : memref<1x16x16x4xf32, #tpu.memory_space<vmem>>, vector<1x1x16x4xf32>
    %211 = vector.shape_cast %210 : vector<1x1x16x4xf32> to vector<16x4xf32>
    %212 = arith.maximumf %209, %211 : vector<16x4xf32>
    %213 = vector.extract_strided_slice %212 {offsets = [0, 0], sizes = [4, 4], strides = [1, 1]} : vector<16x4xf32> to vector<4x4xf32>
    %cst_225 = arith.constant dense<0xFF800000> : vector<4xf32>
    %214 = vector.multi_reduction <maximumf>, %213, %cst_225 [0] : vector<4x4xf32> to vector<4xf32>
    %215 = vector.shape_cast %214 : vector<4xf32> to vector<1x4xf32>
    %216 = vector.extract_strided_slice %212 {offsets = [4, 0], sizes = [4, 4], strides = [1, 1]} : vector<16x4xf32> to vector<4x4xf32>
    %cst_226 = arith.constant dense<0xFF800000> : vector<4xf32>
    %217 = vector.multi_reduction <maximumf>, %216, %cst_226 [0] : vector<4x4xf32> to vector<4xf32>
    %218 = vector.shape_cast %217 : vector<4xf32> to vector<1x4xf32>
    %219 = vector.extract_strided_slice %212 {offsets = [8, 0], sizes = [4, 4], strides = [1, 1]} : vector<16x4xf32> to vector<4x4xf32>
    %cst_227 = arith.constant dense<0xFF800000> : vector<4xf32>
    %220 = vector.multi_reduction <maximumf>, %219, %cst_227 [0] : vector<4x4xf32> to vector<4xf32>
    %221 = vector.shape_cast %220 : vector<4xf32> to vector<1x4xf32>
    %222 = vector.extract_strided_slice %212 {offsets = [12, 0], sizes = [4, 4], strides = [1, 1]} : vector<16x4xf32> to vector<4x4xf32>
    %cst_228 = arith.constant dense<0xFF800000> : vector<4xf32>
    %223 = vector.multi_reduction <maximumf>, %222, %cst_228 [0] : vector<4x4xf32> to vector<4xf32>
    %224 = vector.shape_cast %223 : vector<4xf32> to vector<1x4xf32>
    %c0_229 = arith.constant 0 : index
    %c8_230 = arith.constant 8 : index
    %c0_231 = arith.constant 0 : index
    %c0_232 = arith.constant 0 : index
    %225 = vector.load %arg2[%c0_229, %c8_230, %c0_231, %c0_232] : memref<1x16x16x4xf32, #tpu.memory_space<vmem>>, vector<1x1x16x4xf32>
    %226 = vector.shape_cast %225 : vector<1x1x16x4xf32> to vector<16x4xf32>
    %c0_233 = arith.constant 0 : index
    %c9_234 = arith.constant 9 : index
    %c0_235 = arith.constant 0 : index
    %c0_236 = arith.constant 0 : index
    %227 = vector.load %arg2[%c0_233, %c9_234, %c0_235, %c0_236] : memref<1x16x16x4xf32, #tpu.memory_space<vmem>>, vector<1x1x16x4xf32>
    %228 = vector.shape_cast %227 : vector<1x1x16x4xf32> to vector<16x4xf32>
    %229 = arith.maximumf %226, %228 : vector<16x4xf32>
    %c0_237 = arith.constant 0 : index
    %c10_238 = arith.constant 10 : index
    %c0_239 = arith.constant 0 : index
    %c0_240 = arith.constant 0 : index
    %230 = vector.load %arg2[%c0_237, %c10_238, %c0_239, %c0_240] : memref<1x16x16x4xf32, #tpu.memory_space<vmem>>, vector<1x1x16x4xf32>
    %231 = vector.shape_cast %230 : vector<1x1x16x4xf32> to vector<16x4xf32>
    %232 = arith.maximumf %229, %231 : vector<16x4xf32>
    %c0_241 = arith.constant 0 : index
    %c11_242 = arith.constant 11 : index
    %c0_243 = arith.constant 0 : index
    %c0_244 = arith.constant 0 : index
    %233 = vector.load %arg2[%c0_241, %c11_242, %c0_243, %c0_244] : memref<1x16x16x4xf32, #tpu.memory_space<vmem>>, vector<1x1x16x4xf32>
    %234 = vector.shape_cast %233 : vector<1x1x16x4xf32> to vector<16x4xf32>
    %235 = arith.maximumf %232, %234 : vector<16x4xf32>
    %236 = vector.extract_strided_slice %235 {offsets = [0, 0], sizes = [4, 4], strides = [1, 1]} : vector<16x4xf32> to vector<4x4xf32>
    %cst_245 = arith.constant dense<0xFF800000> : vector<4xf32>
    %237 = vector.multi_reduction <maximumf>, %236, %cst_245 [0] : vector<4x4xf32> to vector<4xf32>
    %238 = vector.shape_cast %237 : vector<4xf32> to vector<1x4xf32>
    %239 = vector.extract_strided_slice %235 {offsets = [4, 0], sizes = [4, 4], strides = [1, 1]} : vector<16x4xf32> to vector<4x4xf32>
    %cst_246 = arith.constant dense<0xFF800000> : vector<4xf32>
    %240 = vector.multi_reduction <maximumf>, %239, %cst_246 [0] : vector<4x4xf32> to vector<4xf32>
    %241 = vector.shape_cast %240 : vector<4xf32> to vector<1x4xf32>
    %242 = vector.extract_strided_slice %235 {offsets = [8, 0], sizes = [4, 4], strides = [1, 1]} : vector<16x4xf32> to vector<4x4xf32>
    %cst_247 = arith.constant dense<0xFF800000> : vector<4xf32>
    %243 = vector.multi_reduction <maximumf>, %242, %cst_247 [0] : vector<4x4xf32> to vector<4xf32>
    %244 = vector.shape_cast %243 : vector<4xf32> to vector<1x4xf32>
    %245 = vector.extract_strided_slice %235 {offsets = [12, 0], sizes = [4, 4], strides = [1, 1]} : vector<16x4xf32> to vector<4x4xf32>
    %cst_248 = arith.constant dense<0xFF800000> : vector<4xf32>
    %246 = vector.multi_reduction <maximumf>, %245, %cst_248 [0] : vector<4x4xf32> to vector<4xf32>
    %247 = vector.shape_cast %246 : vector<4xf32> to vector<1x4xf32>
    %c0_249 = arith.constant 0 : index
    %c12_250 = arith.constant 12 : index
    %c0_251 = arith.constant 0 : index
    %c0_252 = arith.constant 0 : index
    %248 = vector.load %arg2[%c0_249, %c12_250, %c0_251, %c0_252] : memref<1x16x16x4xf32, #tpu.memory_space<vmem>>, vector<1x1x16x4xf32>
    %249 = vector.shape_cast %248 : vector<1x1x16x4xf32> to vector<16x4xf32>
    %c0_253 = arith.constant 0 : index
    %c13_254 = arith.constant 13 : index
    %c0_255 = arith.constant 0 : index
    %c0_256 = arith.constant 0 : index
    %250 = vector.load %arg2[%c0_253, %c13_254, %c0_255, %c0_256] : memref<1x16x16x4xf32, #tpu.memory_space<vmem>>, vector<1x1x16x4xf32>
    %251 = vector.shape_cast %250 : vector<1x1x16x4xf32> to vector<16x4xf32>
    %252 = arith.maximumf %249, %251 : vector<16x4xf32>
    %c0_257 = arith.constant 0 : index
    %c14_258 = arith.constant 14 : index
    %c0_259 = arith.constant 0 : index
    %c0_260 = arith.constant 0 : index
    %253 = vector.load %arg2[%c0_257, %c14_258, %c0_259, %c0_260] : memref<1x16x16x4xf32, #tpu.memory_space<vmem>>, vector<1x1x16x4xf32>
    %254 = vector.shape_cast %253 : vector<1x1x16x4xf32> to vector<16x4xf32>
    %255 = arith.maximumf %252, %254 : vector<16x4xf32>
    %c0_261 = arith.constant 0 : index
    %c15_262 = arith.constant 15 : index
    %c0_263 = arith.constant 0 : index
    %c0_264 = arith.constant 0 : index
    %256 = vector.load %arg2[%c0_261, %c15_262, %c0_263, %c0_264] : memref<1x16x16x4xf32, #tpu.memory_space<vmem>>, vector<1x1x16x4xf32>
    %257 = vector.shape_cast %256 : vector<1x1x16x4xf32> to vector<16x4xf32>
    %258 = arith.maximumf %255, %257 : vector<16x4xf32>
    %259 = vector.extract_strided_slice %258 {offsets = [0, 0], sizes = [4, 4], strides = [1, 1]} : vector<16x4xf32> to vector<4x4xf32>
    %cst_265 = arith.constant dense<0xFF800000> : vector<4xf32>
    %260 = vector.multi_reduction <maximumf>, %259, %cst_265 [0] : vector<4x4xf32> to vector<4xf32>
    %261 = vector.shape_cast %260 : vector<4xf32> to vector<1x4xf32>
    %262 = vector.extract_strided_slice %258 {offsets = [4, 0], sizes = [4, 4], strides = [1, 1]} : vector<16x4xf32> to vector<4x4xf32>
    %cst_266 = arith.constant dense<0xFF800000> : vector<4xf32>
    %263 = vector.multi_reduction <maximumf>, %262, %cst_266 [0] : vector<4x4xf32> to vector<4xf32>
    %264 = vector.shape_cast %263 : vector<4xf32> to vector<1x4xf32>
    %265 = vector.extract_strided_slice %258 {offsets = [8, 0], sizes = [4, 4], strides = [1, 1]} : vector<16x4xf32> to vector<4x4xf32>
    %cst_267 = arith.constant dense<0xFF800000> : vector<4xf32>
    %266 = vector.multi_reduction <maximumf>, %265, %cst_267 [0] : vector<4x4xf32> to vector<4xf32>
    %267 = vector.shape_cast %266 : vector<4xf32> to vector<1x4xf32>
    %268 = vector.extract_strided_slice %258 {offsets = [12, 0], sizes = [4, 4], strides = [1, 1]} : vector<16x4xf32> to vector<4x4xf32>
    %cst_268 = arith.constant dense<0xFF800000> : vector<4xf32>
    %269 = vector.multi_reduction <maximumf>, %268, %cst_268 [0] : vector<4x4xf32> to vector<4xf32>
    %270 = vector.shape_cast %269 : vector<4xf32> to vector<1x4xf32>
    %271 = tpu.concatenate %48, %74, %77, %103, %106, %123, %126, %129, %149, %152, %155, %172, %175, %178, %192, %195 in 0 : vector<1x4xf32>, vector<1x4xf32>, vector<1x4xf32>, vector<1x4xf32>, vector<1x4xf32>, vector<1x4xf32>, vector<1x4xf32>, vector<1x4xf32>, vector<1x4xf32>, vector<1x4xf32>, vector<1x4xf32>, vector<1x4xf32>, vector<1x4xf32>, vector<1x4xf32>, vector<1x4xf32>, vector<1x4xf32> -> vector<16x4xf32>
    %272 = tpu.concatenate %198, %201, %215, %218, %221, %224, %238, %241, %244, %247, %261, %264, %267, %270 in 0 : vector<1x4xf32>, vector<1x4xf32>, vector<1x4xf32>, vector<1x4xf32>, vector<1x4xf32>, vector<1x4xf32>, vector<1x4xf32>, vector<1x4xf32>, vector<1x4xf32>, vector<1x4xf32>, vector<1x4xf32>, vector<1x4xf32>, vector<1x4xf32>, vector<1x4xf32> -> vector<14x4xf32>
    %273 = tpu.concatenate %271, %272 in 0 : vector<16x4xf32>, vector<14x4xf32> -> vector<30x4xf32>
    %c0_269 = arith.constant 0 : index
    %c0_270 = arith.constant 0 : index
    %c0_271 = arith.constant 0 : index
    %274 = vector.load %arg3[%c0_269, %c0_270, %c0_271] : memref<1x30x4xf32, #tpu.memory_space<vmem>>, vector<1x30x4xf32>
    %275 = vector.shape_cast %274 : vector<1x30x4xf32> to vector<30x4xf32>
    %276 = vector.shape_cast %273 : vector<30x4xf32> to vector<1x30x4xf32>
    tpu.vector_store %arg3[%c0_269, %c0_270, %c0_271], %276 {strides = array<i32>} : memref<1x30x4xf32, #tpu.memory_space<vmem>>, vector<1x30x4xf32>,
    return
  }
  func.func @transform_0(%arg0: i32, %arg1: i32) -> (i32, i32, i32, i32) {
    %c0_i32 = arith.constant 0 : i32
    %c0_i32_0 = arith.constant 0 : i32
    %c0_i32_1 = arith.constant 0 : i32
    return %arg0, %c0_i32, %c0_i32_0, %arg1 : i32, i32, i32, i32
  }
  func.func @transform_1(%arg0: i32, %arg1: i32) -> (i32, i32, i32) {
    %c0_i32 = arith.constant 0 : i32
    %c0_i32_0 = arith.constant 0 : i32
    return %arg0, %c0_i32, %arg1 : i32, i32, i32
  }
}

</mosaic_0001>

<llo_original>
// kernel: tpu_custom_call.1
$region0: #{tpu_custom_call.1}
  #allocation0 [shape = 'u32[]', space=smem, size = 0x4, offset = 0x4, fixed_abs, tag = 'smem constant byte address 0x4 - core index']
  #allocation1 [shape = 'u32[144,128]{1,0:T(1,128)}', space=vmem, size = 0x12000, scoped, tag = 'internal scratch']
  %s0 = inlined_call_operand.vmem [shape: f32[2,16,16,4], index: 0, kind: input, shape index: {}]
  %s1 = inlined_call_operand.vmem [shape: f32[2,30,4], index: 1, kind: output, shape index: {}]
  %s2 = sld [smem:[#allocation0]]
  $region37: #{tpu_custom_call.1} parent=0
    _
  %s4 = ssub.s32 1, %s2
  %s5 = scalar_select 0, %s4, %s2
  loop: start=0, step=1, limit=4
  $region2: #{tpu_custom_call.1} parent=0 // loop_pre_header
    _
  $region3: #{tpu_custom_call.1} parent=0 // loop_header
    %s7 = sphi 0, %s11
    %p8 = scmp.ge.s32.totalorder %s7, 4
    %s14 = sphi 0, %s26
    %s15 = sphi 0, %s22
    %s16 = sphi 0, %s14
    %s17 = sphi 0, %s15
    %s18 = sphi 0, %s16
    %s19 = sphi 0, %s17
    %s31 = sphi 0, %s33
    %s34 = sphi 0, %s31
    %s35 = sphi 0, %s34
    %s51 = sphi 0, %s35
    %s59 = sphi 0, %s61
    %s62 = sphi 0, %s59
    %s63 = sphi 0, %s62
    %s79 = sphi 0, %s63
  $region4: #{tpu_custom_call.1} parent=0 // loop_header_branch
    %10 = sbr.rel (%p8) target = $region8
  $region5: #{tpu_custom_call.1} parent=0 // loop_body
    %s12 = ssub.s32 %s7, 1
    %s13 = ssub.s32 %s7, 2
    %s20 = sadd.s32 1, %s15
    %p21 = scmp.ge.s32.totalorder %s20, 1
    %s22 = scalar_select %p21, 0, %s20
    %s23 = sadd.s32 1, %s14
    %s24 = scalar_select %p21, %s23, %s14
    %p25 = scmp.ge.s32.totalorder %s24, 2
    %s26 = scalar_select %p25, 0, %s24
    %s27 = ssub.s32 %s14, %s26
    %s28 = ssub.s32 %s15, %s22
    %s29 = sor.u32 %s27, %s28
    %p30 = scmp.eq.s32.totalorder %s29, 0
    %s32 = sadd.s32 %s31, 1
    %s33 = scalar_select %p30, %s31, %s32
    %p36 = pneg %p30
    %p37 = scmp.eq.s32.totalorder %s7, 1
    %p38 = por %p36, %p37
    %p39 = scmp.ne.s32.totalorder %s31, %s34
    %p40 = scmp.eq.s32.totalorder %s7, 0
    %p41 = por %p39, %p40
    %p42 = scmp.ne.s32.totalorder %s31, %s34
    %p43 = scmp.eq.s32.totalorder %s12, 1
    %p44 = por %p42, %p43
    %p45 = scmp.ne.s32.totalorder %s34, %s35
    %p46 = scmp.eq.s32.totalorder %s12, 0
    %p47 = por %p45, %p46
    %p48 = scmp.ne.s32.totalorder %s34, %s35
    %p49 = scmp.eq.s32.totalorder %s13, 1
    %p50 = por %p48, %p49
    %p52 = scmp.ne.s32.totalorder %s35, %s51
    %p53 = scmp.eq.s32.totalorder %s13, 0
    %p54 = por %p52, %p53
    %s55 = ssub.s32 %s14, %s26
    %s56 = ssub.s32 %s15, %s22
    %s57 = sor.u32 %s55, %s56
    %p58 = scmp.eq.s32.totalorder %s57, 0
    %s60 = sadd.s32 %s59, 1
    %s61 = scalar_select %p58, %s59, %s60
    %p64 = pneg %p58
    %p65 = scmp.eq.s32.totalorder %s7, 1
    %p66 = por %p64, %p65
    %p67 = scmp.ne.s32.totalorder %s59, %s62
    %p68 = scmp.eq.s32.totalorder %s7, 0
    %p69 = por %p67, %p68
    %p70 = scmp.ne.s32.totalorder %s59, %s62
    %p71 = scmp.eq.s32.totalorder %s12, 1
    %p72 = por %p70, %p71
    %p73 = scmp.ne.s32.totalorder %s62, %s63
    %p74 = scmp.eq.s32.totalorder %s12, 0
    %p75 = por %p73, %p74
    %p76 = scmp.ne.s32.totalorder %s62, %s63
    %p77 = scmp.eq.s32.totalorder %s13, 1
    %p78 = por %p76, %p77
    %p80 = scmp.ne.s32.totalorder %s63, %s79
    %p81 = scmp.eq.s32.totalorder %s13, 0
    %p82 = por %p80, %p81
    %p83 = scmp.le.s32.totalorder 1, %s7
    %p84 = scmp.lt.s32.totalorder %s7, 3
    %p85 = pnand %p83, %p84
    %p86 = pneg %p85
    // Predicated region
    $region9: #{tpu_custom_call.1} parent=5 // pred_check
      _
    $region10: #{tpu_custom_call.1} parent=5 // pred_check_branch
      %88 = sbr.rel (%p85) target = $region12
    $region11: #{tpu_custom_call.1} parent=5 // pred_region
      %s89 = ssub.s32 %s7, 1
    $region12: #{tpu_custom_call.1} parent=5 // pred_fallthru
      _
    %p90 = scmp.lt.s32.totalorder %s7, 2
    // Predicated region
    $region13: #{tpu_custom_call.1} parent=5 // pred_check
      %p91 = pneg %p90
    $region14: #{tpu_custom_call.1} parent=5 // pred_check_branch
      %93 = sbr.rel (%p91) target = $region16
    $region15: #{tpu_custom_call.1} parent=5 // pred_region
      // Predicated region
      $region17: #{tpu_custom_call.1} parent=15 // pred_check
        %p94 = pneg %p41
      $region18: #{tpu_custom_call.1} parent=15 // pred_check_branch
        %96 = sbr.rel (%p94) target = $region20
      $region19: #{tpu_custom_call.1} parent=15 // pred_region
        %p97 = scmp.lt.s32.totalorder %s14, 1
        %s98 = scalar_select %p97, %s14, 1
        %p99 = scmp.lt.s32.totalorder %s15, 0
        %s100 = scalar_select %p99, %s15, 0
        %s101 = smul.addr %s98, 32
        %s102 = sadd.s32 %s100, %s101
        %s103 = smul.addr %s102, 8
        %s104 = scalar_lea.vmem %s0, %s103
      $region20: #{tpu_custom_call.1} parent=15 // pred_fallthru
        _
    $region16: #{tpu_custom_call.1} parent=5 // pred_fallthru
      _
    %p105 = scmp.le.s32.totalorder 1, %s7
    %p106 = scmp.lt.s32.totalorder %s7, 3
    %p107 = pnand %p105, %p106
    %p108 = pneg %p107
    // Predicated region
    $region21: #{tpu_custom_call.1} parent=5 // pred_check
      _
    $region22: #{tpu_custom_call.1} parent=5 // pred_check_branch
      %110 = sbr.rel (%p107) target = $region24
    $region23: #{tpu_custom_call.1} parent=5 // pred_region
      %s111 = ssub.s32 %s7, 1
      %p112 = scmp.lt.s32.totalorder %s16, 1
      %s113 = scalar_select %p112, %s16, 1
      %p114 = scmp.lt.s32.totalorder %s17, 0
      %s115 = scalar_select %p114, %s17, 0
      %s116 = smul.addr %s113, 32
      %s117 = sadd.s32 %s115, %s116
      %s118 = smul.addr %s117, 8
      %s119 = scalar_lea.vmem %s0, %s118
      %p120 = pneg %p47
      %p121 = pneg %p44
      %p122 = pneg %p75
      %p123 = pneg %p72
      %p124 = scmp.lt.s32.totalorder %s16, 1
      %s125 = scalar_select %p124, %s16, 1
      %p126 = scmp.lt.s32.totalorder %s17, 0
      %s127 = scalar_select %p126, %s17, 0
      %s128 = smul.addr %s125, 4
      %s129 = sadd.s32 %s127, %s128
      %s130 = smul.addr %s129, 8
      %s131 = scalar_lea.vmem %s1, %s130
      %p132 = scmp.lt.s32.totalorder %s16, 1
      %s133 = scalar_select %p132, %s16, 1
      %p134 = scmp.lt.s32.totalorder %s17, 0
      %s135 = scalar_select %p134, %s17, 0
      %s136 = smul.addr %s133, 32
      %s137 = sadd.s32 %s135, %s136
      %s138 = smul.addr %s137, 8
      %s139 = scalar_lea.vmem %s0, %s138
      %p140 = scmp.lt.s32.totalorder %s16, 1
      %s141 = scalar_select %p140, %s16, 1
      %p142 = scmp.lt.s32.totalorder %s17, 0
      %s143 = scalar_select %p142, %s17, 0
      %s144 = smul.addr %s141, 4
      %s145 = sadd.s32 %s143, %s144
      %s146 = smul.addr %s145, 8
      %s147 = scalar_lea.vmem %s1, %s146
      %v148 = vld [vmem:[%s139] sm:$0xff]
      %v149 = vld [vmem:[%s139 + $0x8] sm:$0xff]
      %s150 = scalar_lea.vmem %s139, 16
      %v151 = vld [vmem:[%s150] sm:$0xff]
      %v152 = vld [vmem:[%s150 + $0x8] sm:$0xff]
      %v153 = vmax.f32 %v148, %v151
      %v154 = vmax.f32 %v149, %v152
      %s155 = scalar_lea.vmem %s139, 32
      %v156 = vld [vmem:[%s155] sm:$0xff]
      %v157 = vld [vmem:[%s155 + $0x8] sm:$0xff]
      %v158 = vmax.f32 %v153, %v156
      %v159 = vmax.f32 %v154, %v157
      %s160 = scalar_lea.vmem %s139, 48
      %v161 = vld [vmem:[%s160] sm:$0xff]
      %v162 = vld [vmem:[%s160 + $0x8] sm:$0xff]
      %v163 = vmax.f32 %v158, %v161
      %v164 = vmax.f32 %v159, %v162
      %s165 = scalar_lea.vmem %s139, 64
      %v166 = vld [vmem:[%s165] sm:$0xff]
      %v167 = vld [vmem:[%s165 + $0x8] sm:$0xff]
      %v168 = vmax.f32 %v163, %v166
      %v169 = vmax.f32 %v164, %v167
      %s170 = scalar_lea.vmem %s139, 80
      %v171 = vld [vmem:[%s170] sm:$0xff]
      %v172 = vld [vmem:[%s170 + $0x8] sm:$0xff]
      %v173 = vmax.f32 %v168, %v171
      %v174 = vmax.f32 %v169, %v172
      %s175 = scalar_lea.vmem %s139, 96
      %v176 = vld [vmem:[%s175] sm:$0xff]
      %v177 = vld [vmem:[%s175 + $0x8] sm:$0xff]
      %v178 = vmax.f32 %v173, %v176
      %v179 = vmax.f32 %v174, %v177
      %s180 = scalar_lea.vmem %s139, 112
      %v181 = vld [vmem:[%s180] sm:$0xff]
      %v182 = vld [vmem:[%s180 + $0x8] sm:$0xff]
      %v183 = vmax.f32 %v178, %v181
      %v184 = vmax.f32 %v179, %v182
      %s185 = scalar_lea.vmem %s139, 128
      %v186 = vld [vmem:[%s185] sm:$0xff]
      %v187 = vld [vmem:[%s185 + $0x8] sm:$0xff]
      %v188 = vmax.f32 %v183, %v186
      %v189 = vmax.f32 %v184, %v187
      %s190 = scalar_lea.vmem %s139, 144
      %v191 = vld [vmem:[%s190] sm:$0xff]
      %v192 = vld [vmem:[%s190 + $0x8] sm:$0xff]
      %v193 = vmax.f32 %v188, %v191
      %v194 = vmax.f32 %v189, %v192
      %s195 = scalar_lea.vmem %s139, 160
      %v196 = vld [vmem:[%s195] sm:$0xff]
      %v197 = vld [vmem:[%s195 + $0x8] sm:$0xff]
      %v198 = vmax.f32 %v193, %v196
      %v199 = vmax.f32 %v194, %v197
      %s200 = scalar_lea.vmem %s139, 176
      %v201 = vld [vmem:[%s200] sm:$0xff]
      %v202 = vld [vmem:[%s200 + $0x8] sm:$0xff]
      %v203 = vmax.f32 %v198, %v201
      %v204 = vmax.f32 %v199, %v202
      %s205 = scalar_lea.vmem %s139, 192
      %v206 = vld [vmem:[%s205] sm:$0xff]
      %v207 = vld [vmem:[%s205 + $0x8] sm:$0xff]
      %v208 = vmax.f32 %v203, %v206
      %v209 = vmax.f32 %v204, %v207
      %s210 = scalar_lea.vmem %s139, 208
      %v211 = vld [vmem:[%s210] sm:$0xff]
      %v212 = vld [vmem:[%s210 + $0x8] sm:$0xff]
      %v213 = vmax.f32 %v208, %v211
      %v214 = vmax.f32 %v209, %v212
      %s215 = scalar_lea.vmem %s139, 224
      %v216 = vld [vmem:[%s215] sm:$0xff]
      %v217 = vld [vmem:[%s215 + $0x8] sm:$0xff]
      %v218 = vmax.f32 %v213, %v216
      %v219 = vmax.f32 %v214, %v217
      %s220 = scalar_lea.vmem %s139, 240
      %v221 = vld [vmem:[%s220] sm:$0xff]
      %v222 = vld [vmem:[%s220 + $0x8] sm:$0xff]
      %v223 = vmax.f32 %v218, %v221
      %v224 = vmax.f32 %v219, %v222
      %vm225 = vcmask 31744
      %v226 = vsel %vm225, %v223, -inf
      %v227 = vsel %vm225, %v224, -inf
      %v228 = vmax.f32 %v226, %v227
      %v229 = vrot.slane %v228, 4
      %v230 = vmax.f32 %v228, %v229
      %v231 = vrot.slane %v230, 2
      %v232 = vmax.f32 %v230, %v231
      %v233 = vrot.slane %v232, 1
      %v234 = vmax.f32 %v232, %v233
      %v235 = vsel %vm225, %v183, -inf
      %v236 = vrot.slane %v235, 4
      %v237 = vmax.f32 %v235, %v236
      %v238 = vrot.slane %v237, 2
      %v239 = vmax.f32 %v237, %v238
      %v240 = vrot.slane %v239, 1
      %v241 = vmax.f32 %v239, %v240
      %v242 = vsel %vm225, %v184, -inf
      %v243 = vrot.slane %v242, 4
      %v244 = vmax.f32 %v242, %v243
      %v245 = vrot.slane %v244, 2
      %v246 = vmax.f32 %v244, %v245
      %v247 = vrot.slane %v246, 1
      %v248 = vmax.f32 %v246, %v247
      %v249 = vmax.f32 %v186, %v191
      %v250 = vmax.f32 %v187, %v192
      %v251 = vmax.f32 %v249, %v196
      %v252 = vmax.f32 %v250, %v197
      %v253 = vmax.f32 %v251, %v201
      %v254 = vmax.f32 %v252, %v202
      %v255 = vmax.f32 %v253, %v206
      %v256 = vmax.f32 %v254, %v207
      %v257 = vmax.f32 %v255, %v211
      %v258 = vmax.f32 %v256, %v212
      %v259 = vmax.f32 %v257, %v216
      %v260 = vmax.f32 %v258, %v217
      %v261 = vmax.f32 %v259, %v221
      %v262 = vmax.f32 %v260, %v222
      %v263 = vsel %vm225, %v261, -inf
      %v264 = vrot.slane %v263, 4
      %v265 = vmax.f32 %v263, %v264
      %v266 = vrot.slane %v265, 2
      %v267 = vmax.f32 %v265, %v266
      %v268 = vrot.slane %v267, 1
      %v269 = vmax.f32 %v267, %v268
      %v270 = vsel %vm225, %v262, -inf
      %v271 = vrot.slane %v270, 4
      %v272 = vmax.f32 %v270, %v271
      %v273 = vrot.slane %v272, 2
      %v274 = vmax.f32 %v272, %v273
      %v275 = vrot.slane %v274, 1
      %v276 = vmax.f32 %v274, %v275
      %vm277 = vcmask 28672
      %v278 = vsel %vm277, %v168, -inf
      %v279 = vrot.slane %v278, 4
      %v280 = vmax.f32 %v278, %v279
      %v281 = vrot.slane %v280, 2
      %v282 = vmax.f32 %v280, %v281
      %v283 = vrot.slane %v282, 1
      %v284 = vmax.f32 %v282, %v283
      %vm285 = vcmask 31749
      %v286 = vsel %vm285, %v168, -inf
      %vm287 = vcmask 26624
      %v288 = vsel %vm287, %v169, -inf
      %v289 = vmax.f32 %v286, %v288
      %v290 = vrot.slane %v289, 4
      %v291 = vmax.f32 %v289, %v290
      %v292 = vrot.slane %v291, 2
      %v293 = vmax.f32 %v291, %v292
      %v294 = vrot.slane %v293, 1
      %v295 = vmax.f32 %v293, %v294
      %vm296 = vcmask 31747
      %v297 = vsel %vm296, %v169, -inf
      %v298 = vrot.slane %v297, 4
      %v299 = vmax.f32 %v297, %v298
      %v300 = vrot.slane %v299, 2
      %v301 = vmax.f32 %v299, %v300
      %v302 = vrot.slane %v301, 1
      %v303 = vmax.f32 %v301, %v302
      %v304 = vmax.f32 %v171, %v176
      %v305 = vmax.f32 %v172, %v177
      %v306 = vmax.f32 %v304, %v181
      %v307 = vmax.f32 %v305, %v182
      %v308 = vmax.f32 %v306, %v186
      %v309 = vmax.f32 %v307, %v187
      %v310 = vmax.f32 %v308, %v191
      %v311 = vmax.f32 %v309, %v192
      %v312 = vmax.f32 %v310, %v196
      %v313 = vmax.f32 %v311, %v197
      %v314 = vsel %vm277, %v312, -inf
      %v315 = vrot.slane %v314, 4
      %v316 = vmax.f32 %v314, %v315
      %v317 = vrot.slane %v316, 2
      %v318 = vmax.f32 %v316, %v317
      %v319 = vrot.slane %v318, 1
      %v320 = vmax.f32 %v318, %v319
      %v321 = vsel %vm285, %v312, -inf
      %v322 = vsel %vm287, %v313, -inf
      %v323 = vmax.f32 %v321, %v322
      %v324 = vrot.slane %v323, 4
      %v325 = vmax.f32 %v323, %v324
      %v326 = vrot.slane %v325, 2
      %v327 = vmax.f32 %v325, %v326
      %v328 = vrot.slane %v327, 1
      %v329 = vmax.f32 %v327, %v328
      %v330 = vsel %vm296, %v313, -inf
      %v331 = vrot.slane %v330, 4
      %v332 = vmax.f32 %v330, %v331
      %v333 = vrot.slane %v332, 2
      %v334 = vmax.f32 %v332, %v333
      %v335 = vrot.slane %v334, 1
      %v336 = vmax.f32 %v334, %v335
      %v337 = vmax.f32 %v201, %v206
      %v338 = vmax.f32 %v202, %v207
      %v339 = vmax.f32 %v337, %v211
      %v340 = vmax.f32 %v338, %v212
      %v341 = vmax.f32 %v339, %v216
      %v342 = vmax.f32 %v340, %v217
      %v343 = vmax.f32 %v341, %v221
      %v344 = vmax.f32 %v342, %v222
      %v345 = vsel %vm277, %v343, -inf
      %v346 = vrot.slane %v345, 4
      %v347 = vmax.f32 %v345, %v346
      %v348 = vrot.slane %v347, 2
      %v349 = vmax.f32 %v347, %v348
      %v350 = vrot.slane %v349, 1
      %v351 = vmax.f32 %v349, %v350
      %v352 = vsel %vm285, %v343, -inf
      %v353 = vsel %vm287, %v344, -inf
      %v354 = vmax.f32 %v352, %v353
      %v355 = vrot.slane %v354, 4
      %v356 = vmax.f32 %v354, %v355
      %v357 = vrot.slane %v356, 2
      %v358 = vmax.f32 %v356, %v357
      %v359 = vrot.slane %v358, 1
      %v360 = vmax.f32 %v358, %v359
      %v361 = vsel %vm296, %v344, -inf
      %v362 = vrot.slane %v361, 4
      %v363 = vmax.f32 %v361, %v362
      %v364 = vrot.slane %v363, 2
      %v365 = vmax.f32 %v363, %v364
      %v366 = vrot.slane %v365, 1
      %v367 = vmax.f32 %v365, %v366
      %vm368 = vcmask 27648
      %v369 = vsel %vm368, %v163, -inf
      %v370 = vrot.slane %v369, 4
      %v371 = vmax.f32 %v369, %v370
      %v372 = vrot.slane %v371, 2
      %v373 = vmax.f32 %v371, %v372
      %v374 = vrot.slane %v373, 1
      %v375 = vmax.f32 %v373, %v374
      %vm376 = vcmask 31748
      %v377 = vsel %vm376, %v163, -inf
      %v378 = vrot.slane %v377, 4
      %v379 = vmax.f32 %v377, %v378
      %v380 = vrot.slane %v379, 2
      %v381 = vmax.f32 %v379, %v380
      %v382 = vrot.slane %v381, 1
      %v383 = vmax.f32 %v381, %v382
      %v384 = vsel %vm368, %v164, -inf
      %v385 = vrot.slane %v384, 4
      %v386 = vmax.f32 %v384, %v385
      %v387 = vrot.slane %v386, 2
      %v388 = vmax.f32 %v386, %v387
      %v389 = vrot.slane %v388, 1
      %v390 = vmax.f32 %v388, %v389
      %v391 = vsel %vm376, %v164, -inf
      %v392 = vrot.slane %v391, 4
      %v393 = vmax.f32 %v391, %v392
      %v394 = vrot.slane %v393, 2
      %v395 = vmax.f32 %v393, %v394
      %v396 = vrot.slane %v395, 1
      %v397 = vmax.f32 %v395, %v396
      %v398 = vmax.f32 %v166, %v171
      %v399 = vmax.f32 %v167, %v172
      %v400 = vmax.f32 %v398, %v176
      %v401 = vmax.f32 %v399, %v177
      %v402 = vmax.f32 %v400, %v181
      %v403 = vmax.f32 %v401, %v182
      %v404 = vsel %vm368, %v402, -inf
      %v405 = vrot.slane %v404, 4
      %v406 = vmax.f32 %v404, %v405
      %v407 = vrot.slane %v406, 2
      %v408 = vmax.f32 %v406, %v407
      %v409 = vrot.slane %v408, 1
      %v410 = vmax.f32 %v408, %v409
      %v411 = vsel %vm376, %v402, -inf
      %v412 = vrot.slane %v411, 4
      %v413 = vmax.f32 %v411, %v412
      %v414 = vrot.slane %v413, 2
      %v415 = vmax.f32 %v413, %v414
      %v416 = vrot.slane %v415, 1
      %v417 = vmax.f32 %v415, %v416
      %v418 = vsel %vm368, %v403, -inf
      %v419 = vrot.slane %v418, 4
      %v420 = vmax.f32 %v418, %v419
      %v421 = vrot.slane %v420, 2
      %v422 = vmax.f32 %v420, %v421
      %v423 = vrot.slane %v422, 1
      %v424 = vmax.f32 %v422, %v423
      %v425 = vsel %vm376, %v403, -inf
      %v426 = vrot.slane %v425, 4
      %v427 = vmax.f32 %v425, %v426
      %v428 = vrot.slane %v427, 2
      %v429 = vmax.f32 %v427, %v428
      %v430 = vrot.slane %v429, 1
      %v431 = vmax.f32 %v429, %v430
      %v432 = vsel %vm368, %v253, -inf
      %v433 = vrot.slane %v432, 4
      %v434 = vmax.f32 %v432, %v433
      %v435 = vrot.slane %v434, 2
      %v436 = vmax.f32 %v434, %v435
      %v437 = vrot.slane %v436, 1
      %v438 = vmax.f32 %v436, %v437
      %v439 = vsel %vm376, %v253, -inf
      %v440 = vrot.slane %v439, 4
      %v441 = vmax.f32 %v439, %v440
      %v442 = vrot.slane %v441, 2
      %v443 = vmax.f32 %v441, %v442
      %v444 = vrot.slane %v443, 1
      %v445 = vmax.f32 %v443, %v444
      %v446 = vsel %vm368, %v254, -inf
      %v447 = vrot.slane %v446, 4
      %v448 = vmax.f32 %v446, %v447
      %v449 = vrot.slane %v448, 2
      %v450 = vmax.f32 %v448, %v449
      %v451 = vrot.slane %v450, 1
      %v452 = vmax.f32 %v450, %v451
      %v453 = vsel %vm376, %v254, -inf
      %v454 = vrot.slane %v453, 4
      %v455 = vmax.f32 %v453, %v454
      %v456 = vrot.slane %v455, 2
      %v457 = vmax.f32 %v455, %v456
      %v458 = vrot.slane %v457, 1
      %v459 = vmax.f32 %v457, %v458
      %v460 = vmax.f32 %v206, %v211
      %v461 = vmax.f32 %v207, %v212
      %v462 = vmax.f32 %v460, %v216
      %v463 = vmax.f32 %v461, %v217
      %v464 = vmax.f32 %v462, %v221
      %v465 = vmax.f32 %v463, %v222
      %v466 = vsel %vm368, %v464, -inf
      %v467 = vrot.slane %v466, 4
      %v468 = vmax.f32 %v466, %v467
      %v469 = vrot.slane %v468, 2
      %v470 = vmax.f32 %v468, %v469
      %v471 = vrot.slane %v470, 1
      %v472 = vmax.f32 %v470, %v471
      %v473 = vsel %vm376, %v464, -inf
      %v474 = vrot.slane %v473, 4
      %v475 = vmax.f32 %v473, %v474
      %v476 = vrot.slane %v475, 2
      %v477 = vmax.f32 %v475, %v476
      %v478 = vrot.slane %v477, 1
      %v479 = vmax.f32 %v477, %v478
      %v480 = vsel %vm368, %v465, -inf
      %v481 = vrot.slane %v480, 4
      %v482 = vmax.f32 %v480, %v481
      %v483 = vrot.slane %v482, 2
      %v484 = vmax.f32 %v482, %v483
      %v485 = vrot.slane %v484, 1
      %v486 = vmax.f32 %v484, %v485
      %v487 = vsel %vm376, %v465, -inf
      %v488 = vrot.slane %v487, 4
      %v489 = vmax.f32 %v487, %v488
      %v490 = vrot.slane %v489, 2
      %v491 = vmax.f32 %v489, %v490
      %v492 = vrot.slane %v491, 1
      %v493 = vmax.f32 %v491, %v492
      %vm494 = vcmask 1040384
      %v495 = vsel %vm494, %v234, %v241
      %vm496 = vcmask 1041408
      %v497 = vsel %vm496, %v495, %v248
      %vm498 = vcmask 1042432
      %v499 = vsel %vm498, %v497, %v269
      %vm500 = vcmask 1043456
      %v501 = vsel %vm500, %v499, %v276
      %vm502 = vcmask 1044480
      %v503 = vsel %vm502, %v501, %v284
      %vm504 = vcmask 1045504
      %v505 = vsel %vm504, %v503, %v295
      %vm506 = vcmask 1046528
      %v507 = vsel %vm506, %v505, %v303
      %v508 = vsel %vm494, %v320, %v329
      %v509 = vsel %vm496, %v508, %v336
      %v510 = vsel %vm498, %v509, %v351
      %v511 = vsel %vm500, %v510, %v360
      %v512 = vsel %vm502, %v511, %v367
      %v513 = vsel %vm504, %v512, %v375
      %v514 = vsel %vm506, %v513, %v383
      %v515 = vsel %vm494, %v390, %v397
      %v516 = vsel %vm496, %v515, %v410
      %v517 = vsel %vm498, %v516, %v417
      %v518 = vsel %vm500, %v517, %v424
      %v519 = vsel %vm502, %v518, %v431
      %v520 = vsel %vm504, %v519, %v438
      %v521 = vsel %vm506, %v520, %v445
      %v522 = vsel %vm494, %v452, %v459
      %v523 = vsel %vm496, %v522, %v472
      %v524 = vsel %vm498, %v523, %v479
      %v525 = vsel %vm500, %v524, %v486
      %v526 = vsel %vm502, %v525, %v493
      %527 = vst.msk [vmem:[%s147] sm:$0xff] %vm225, %v507
      %528 = vst.msk [vmem:[%s147 + $0x8] sm:$0xff] %vm225, %v514
      %529 = vst.msk [vmem:[%s147 + $0x10] sm:$0xff] %vm225, %v521
      %vm530 = vcmask 29696
      %531 = vst.msk [vmem:[%s147 + $0x18] sm:$0x3f] %vm530, %v526
      %p532 = scmp.lt.s32.totalorder %s16, 1
      %s533 = scalar_select %p532, %s16, 1
      %p534 = scmp.lt.s32.totalorder %s17, 0
      %s535 = scalar_select %p534, %s17, 0
      %s536 = smul.addr %s533, 4
      %s537 = sadd.s32 %s535, %s536
      %s538 = smul.addr %s537, 8
      %s539 = scalar_lea.vmem %s1, %s538
      // Predicated region
      $region25: #{tpu_custom_call.1} parent=23 // pred_check
        %p540 = pneg %p72
      $region26: #{tpu_custom_call.1} parent=23 // pred_check_branch
        %542 = sbr.rel (%p540) target = $region28
      $region27: #{tpu_custom_call.1} parent=23 // pred_region
        _
      $region28: #{tpu_custom_call.1} parent=23 // pred_fallthru
        _
    $region24: #{tpu_custom_call.1} parent=5 // pred_fallthru
      _
    %p543 = scmp.le.s32.totalorder 2, %s7
    // Predicated region
    $region29: #{tpu_custom_call.1} parent=5 // pred_check
      %p544 = pneg %p543
    $region30: #{tpu_custom_call.1} parent=5 // pred_check_branch
      %546 = sbr.rel (%p544) target = $region32
    $region31: #{tpu_custom_call.1} parent=5 // pred_region
      %s547 = ssub.s32 %s7, 2
      // Predicated region
      $region33: #{tpu_custom_call.1} parent=31 // pred_check
        %p548 = pneg %p78
      $region34: #{tpu_custom_call.1} parent=31 // pred_check_branch
        %550 = sbr.rel (%p548) target = $region36
      $region35: #{tpu_custom_call.1} parent=31 // pred_region
        %p551 = scmp.lt.s32.totalorder %s18, 1
        %s552 = scalar_select %p551, %s18, 1
        %p553 = scmp.lt.s32.totalorder %s19, 0
        %s554 = scalar_select %p553, %s19, 0
        %s555 = smul.addr %s552, 4
        %s556 = sadd.s32 %s554, %s555
        %s557 = smul.addr %s556, 8
        %s558 = scalar_lea.vmem %s1, %s557
      $region36: #{tpu_custom_call.1} parent=31 // pred_fallthru
        _
    $region32: #{tpu_custom_call.1} parent=5 // pred_fallthru
      _
  $region6: #{tpu_custom_call.1} parent=0 // loop_footer
    %s11 = sadd.s32 1, %s7
  $region7: #{tpu_custom_call.1} parent=0 // loop_footer_branch
    %6 = sbr.rel target = $region3
  $region8: #{tpu_custom_call.1} parent=0 // loop_exit
    _

</llo_original>
